<compile_context>
chip_gen: v5e
topology: v5e:2x2
jax: 0.10.0
libtpu: 0.0.40
codegen_flags: <defaults>
</compile_context>

<pallas_src>
import jax
import jax.numpy as jnp
from jax.experimental import pallas as pl
from jax.experimental.pallas import tpu as pltpu

LN_EPS = 1e-5


# ----------------------------------------------------------------------------- kernel
def moe_kernel(x_ref, wc_ref, bc_ref, gx_ref, w2_ref, b2_ref, o_ref):
    # x tile: (TN, H) float32
    x = x_ref[...].astype(jnp.float32)
    inv_h = 1.0 / x.shape[-1]

    # ---- shared LayerNorm statistics, one reduction pass (affine folded into weights) ----
    s1 = jnp.sum(x, axis=-1, keepdims=True)
    s2 = jnp.sum(x * x, axis=-1, keepdims=True)
    mean = s1 * inv_h
    var = s2 * inv_h - mean * mean                                # biased, like nn.LayerNorm
    x_hat = (x - mean) * jax.lax.rsqrt(var + LN_EPS)              # (TN, H) f32
    x_bf = x_hat.astype(jnp.bfloat16)                             # MXU operand

    # ---- one fused matmul: [gating logits | all-expert W1 pre-activations] ----
    y = jnp.dot(x_bf, wc_ref[...],
                preferred_element_type=jnp.float32) + bc_ref[...]  # (TN, GP + E*Hh)

    gp = gx_ref.shape[0]                                          # lane-dense gating width (128)
    logits = y[:, :gp]                                            # padded lanes carry -1e30 bias
    h = jnp.maximum(y[:, gp:], 0.0)                               # (TN, E*Hh) ReLU hidden

    # ---- softmax over experts (padded lanes -> exp(-1e30) == 0, so exact) ----
    logits = logits - jnp.max(logits, axis=-1, keepdims=True)
    exp_l = jnp.exp(logits)
    denom = jnp.sum(exp_l, axis=-1, keepdims=True)
    gates = exp_l * pl.reciprocal(denom, approx=True)             # (TN, GP) f32
    gates_bf = gates.astype(jnp.bfloat16)

    # gate-weighted output bias: sum_k gate_k * b2_k  (one small bf16 matmul, K = GP)
    acc = jnp.dot(gates_bf, b2_ref[...], preferred_element_type=jnp.float32)   # (TN, H)

    # expand gates across Hh lanes via a 0/1 expansion matmul (lane-dense, no XLU broadcast)
    gexp = jnp.dot(gates_bf, gx_ref[...], preferred_element_type=jnp.float32)  # (TN, E*Hh)

    # gate-weighted hidden, then one fused W2 matmul across all experts (K = E*Hh)
    gh = (h * gexp).astype(jnp.bfloat16)
    acc = acc + jnp.dot(gh, w2_ref[...], preferred_element_type=jnp.float32)   # (TN, H)

    o_ref[...] = acc.astype(o_ref.dtype)


# ----------------------------------------------------------------------------- wrapper helpers
def _vmem_capacity_bytes():
    try:
        info = pltpu.get_tpu_info()
        cap = getattr(info, "vmem_capacity_bytes", None)
        if cap:
            return int(cap)
    except Exception:
        pass
    return 64 << 20  # conservative default (v7x-class per-TensorCore VMEM)


def _pick_tile_n(n, requested, fits, prefer_multi_step):
    if requested is not None:
        assert n % requested == 0
        return requested
    cands = [t for t in (256, 128, 64, 32, 16, 8) if t <= n and n % t == 0]
    if not cands:
        return n
    good = [t for t in cands if fits(t)]
    pool = good if good else cands[-1:]   # if nothing fits, take the smallest and hope
    if prefer_multi_step:
        multi = [t for t in pool if (n // t) >= 2 and (n // t) % 2 == 0]
        if multi:
            return multi[0]
    return pool[0]


# ----------------------------------------------------------------------------- wrapper
def moe_forward(x, params, *, tile_n=None):
    """x: (batch, seq, hidden) float32 -> (batch, seq, hidden) float32."""
    B, S, H = x.shape
    N = B * S
    E, _, Hh = params["w1"].shape
    EH = E * Hh
    GP = max(128, pl.cdiv(E, 128) * 128)        # lane-dense gating width

    f32, bf16 = jnp.float32, jnp.bfloat16

    # ---- fold LN affines into following linears; pad gating to 128 lanes ----
    wgf = params["g_gamma"].reshape(H, 1) * params["wg"]                    # (H, E)
    bgf = params["g_beta"] @ params["wg"] + params["bg"]                    # (1, E)
    wg_pad = jnp.zeros((H, GP), f32).at[:, :E].set(wgf)
    bg_pad = jnp.full((1, GP), -1e30, f32).at[:, :E].set(bgf)               # padded -> softmax 0

    w1f = params["e_gamma"][:, :, None] * params["w1"]                      # (E, H, Hh)
    b1f = params["b1"] + jnp.einsum("eh,ehk->ek", params["e_beta"], params["w1"])
    w1_wide = w1f.transpose(1, 0, 2).reshape(H, EH)                         # expert k -> cols k*Hh:(k+1)*Hh
    b1_wide = b1f.reshape(1, EH)

    # fused [gating | W1] weight & bias
    wc = jnp.concatenate([wg_pad, w1_wide], axis=1).astype(bf16)            # (H, GP+EH)
    bc = jnp.concatenate([bg_pad, b1_wide], axis=1)                         # (1, GP+EH) f32

    # 0/1 gate-expansion matrix: gates (TN,GP) @ gexp (GP,EH) broadcasts gate_k over Hh lanes
    gexp_mat = jnp.zeros((GP, EH), f32)
    gexp_mat = gexp_mat.at[:E, :].set(jnp.repeat(jnp.eye(E, dtype=f32), Hh, axis=1))
    gexp_mat = gexp_mat.astype(bf16)

    w2_flat = params["w2"].reshape(EH, H).astype(bf16)                      # fused W2
    b2_pad = jnp.zeros((GP, H), f32).at[:E, :].set(params["b2"]).astype(bf16)

    x_flat = x.reshape(N, H)

    # ---- generation-aware VMEM budget ----
    cap = _vmem_capacity_bytes()
    if cap >= (96 << 20):                        # v5e / v6e: 128 MiB physical VMEM
        vmem_limit = int(min(cap, 128 << 20) * 0.82)     # ~105 MiB, headroom for compiler scratch
        prefer_multi_step = False                # single TensorCore per chip
    else:                                        # v7x-class: 64 MiB per TC, 2 TCs
        vmem_limit = int(max(cap - (6 << 20), 32 << 20))
        prefer_multi_step = True

    # resident weights are single-buffered (pl.Buffered(1))
    weight_bytes = (H * (GP + EH) * 2            # wc  bf16
                    + (GP + EH) * 4              # bc  f32
                    + GP * EH * 2                # gate expansion bf16
                    + EH * H * 2                 # w2  bf16
                    + GP * H * 2)                # b2  bf16

    def fits(t):
        io_bytes = 2 * 2 * t * H * 4                        # double-buffered x + out tiles (f32)
        inter_bytes = t * (3 * H + 3 * (GP + EH)) * 4       # live f32 intermediates
        return weight_bytes + io_bytes + inter_bytes + (4 << 20) <= vmem_limit

    tile_n = _pick_tile_n(N, tile_n, fits, prefer_multi_step)

    single = lambda shape: pl.BlockSpec(shape, lambda i: tuple(0 for _ in shape),
                                        pipeline_mode=pl.Buffered(1))

    out_flat = pl.pallas_call(
        moe_kernel,
        out_shape=jax.ShapeDtypeStruct((N, H), x.dtype),
        grid_spec=pltpu.PrefetchScalarGridSpec(
            num_scalar_prefetch=0,
            grid=(N // tile_n,),
            in_specs=[
                pl.BlockSpec((tile_n, H), lambda i: (i, 0)),   # x tokens (double-buffered)
                single((H, GP + EH)),      # fused [gating | W1] weights (LN folded, bf16)
                single((1, GP + EH)),      # fused biases (padded gating lanes = -1e30)
                single((GP, EH)),          # 0/1 gate expansion (bf16)
                single((EH, H)),           # fused expert W2 (bf16)
                single((GP, H)),           # expert b2 (padded rows = 0, bf16)
            ],
            out_specs=pl.BlockSpec((tile_n, H), lambda i: (i, 0)),
        ),
        compiler_params=pltpu.CompilerParams(
            dimension_semantics=("parallel",),
            vmem_limit_bytes=vmem_limit),
    )(x_flat, wc, bc, gexp_mat, w2_flat, b2_pad)
    return out_flat.reshape(B, S, H)


# ----------------------------------------------------------------------------- params / reference
def init_params(key, hidden_size, num_experts=2):
    H, E, Hh = hidden_size, num_experts, hidden_size // 2
    keys = jax.random.split(key, 8)
    scale = 0.02
    return {
        # gating network
        "g_gamma": jnp.ones((1, H), jnp.float32),
        "g_beta": jnp.zeros((1, H), jnp.float32),
        "wg": scale * jax.random.normal(keys[0], (H, E), jnp.float32),
        "bg": scale * jax.random.normal(keys[1], (1, E), jnp.float32),
        # experts (stacked on leading expert axis), weights stored (in, out)
        "e_gamma": jnp.ones((E, H), jnp.float32),
        "e_beta": jnp.zeros((E, H), jnp.float32),
        "w1": scale * jax.random.normal(keys[2], (E, H, Hh), jnp.float32),
        "b1": scale * jax.random.normal(keys[3], (E, Hh), jnp.float32),
        "w2": scale * jax.random.normal(keys[4], (E, Hh, H), jnp.float32),
        "b2": scale * jax.random.normal(keys[5], (E, H), jnp.float32),
    }


def _layernorm(v, gamma, beta):
    mean = jnp.mean(v, axis=-1, keepdims=True)
    var = jnp.mean((v - mean) ** 2, axis=-1, keepdims=True)
    return (v - mean) * jax.lax.rsqrt(var + LN_EPS) * gamma + beta


def moe_reference(x, params):
    """Pure-JAX f32 reference mirroring the PyTorch forward."""
    B, S, H = x.shape
    xf = x.reshape(-1, H)
    xg = _layernorm(xf, params["g_gamma"], params["g_beta"])
    gates = jax.nn.softmax(xg @ params["wg"] + params["bg"], axis=-1)       # (N, E)
    outs = []
    for k in range(params["w1"].shape[0]):
        xe = _layernorm(xf, params["e_gamma"][k], params["e_beta"][k])
        h = jax.nn.relu(xe @ params["w1"][k] + params["b1"][k])
        outs.append(h @ params["w2"][k] + params["b2"][k])
    expert_out = jnp.stack(outs, axis=1)                                     # (N, E, H)
    y = jnp.sum(gates[..., None] * expert_out, axis=1)
    return y.reshape(B, S, H)


# ----------------------------------------------------------------------------- demo
if __name__ == "__main__":
    batch, seq, hidden = 2, 8, 32
    key = jax.random.PRNGKey(0)
    k_x, k_p = jax.random.split(key)
    x = jax.random.normal(k_x, (batch, seq, hidden), jnp.float32)
    params = init_params(k_p, hidden, num_experts=2)

    out = moe_forward(x, params)
    out = jax.block_until_ready(out)

    ref = moe_reference(x, params)
    assert out.shape == (batch, seq, hidden)
    # bf16 MXU operands + approx reciprocal -> relaxed tolerance vs f32 reference
    assert jnp.allclose(out, ref, atol=1e-2, rtol=1e-2), "mismatch vs reference"
    print("KERNEL_OK")
</pallas_src>

<mosaic_0001>
module attributes {stable_mosaic.version = 11 : i64} {
  func.func @moe_kernel(%arg0: i32, %arg1: memref<8x32xf32, #tpu.memory_space<vmem>>, %arg2: memref<32x160xbf16, #tpu.memory_space<vmem>>, %arg3: memref<1x160xf32, #tpu.memory_space<vmem>>, %arg4: memref<128x32xbf16, #tpu.memory_space<vmem>>, %arg5: memref<32x32xbf16, #tpu.memory_space<vmem>>, %arg6: memref<128x32xbf16, #tpu.memory_space<vmem>>, %arg7: memref<8x32xf32, #tpu.memory_space<vmem>>) attributes {dimension_semantics = [#tpu.dimension_semantics<parallel>], iteration_bounds = array<i64: 2>, scalar_prefetch = 0 : i64, scratch_operands = 0 : i64, tpu.core_type = #tpu.core_type<tc>, window_params = [{transform_indices = @transform_0, window_bounds = array<i64: 8, 32>}, {pipeline_mode = #tpu.pipeline_mode<synchronous>, transform_indices = @transform_1, window_bounds = array<i64: 32, 160>}, {pipeline_mode = #tpu.pipeline_mode<synchronous>, transform_indices = @transform_2, window_bounds = array<i64: 1, 160>}, {pipeline_mode = #tpu.pipeline_mode<synchronous>, transform_indices = @transform_3, window_bounds = array<i64: 128, 32>}, {pipeline_mode = #tpu.pipeline_mode<synchronous>, transform_indices = @transform_4, window_bounds = array<i64: 32, 32>}, {pipeline_mode = #tpu.pipeline_mode<synchronous>, transform_indices = @transform_5, window_bounds = array<i64: 128, 32>}, {transform_indices = @transform_6, window_bounds = array<i64: 8, 32>}]} {
    %c0 = arith.constant 0 : index
    %c0_0 = arith.constant 0 : index
    %0 = vector.load %arg1[%c0, %c0_0] : memref<8x32xf32, #tpu.memory_space<vmem>>, vector<8x32xf32>
    %cst = arith.constant dense<0.000000e+00> : vector<8xf32>
    %1 = vector.multi_reduction <add>, %0, %cst [1] : vector<8x32xf32> to vector<8xf32>
    %2 = vector.shape_cast %1 : vector<8xf32> to vector<8x1xf32>
    %3 = arith.mulf %0, %0 : vector<8x32xf32>
    %cst_1 = arith.constant dense<0.000000e+00> : vector<8xf32>
    %4 = vector.multi_reduction <add>, %3, %cst_1 [1] : vector<8x32xf32> to vector<8xf32>
    %5 = vector.shape_cast %4 : vector<8xf32> to vector<8x1xf32>
    %cst_2 = arith.constant 3.125000e-02 : f32
    %6 = vector.broadcast %cst_2 : f32 to vector<8x1xf32>
    %7 = arith.mulf %2, %6 : vector<8x1xf32>
    %cst_3 = arith.constant 3.125000e-02 : f32
    %8 = vector.broadcast %cst_3 : f32 to vector<8x1xf32>
    %9 = arith.mulf %5, %8 : vector<8x1xf32>
    %10 = arith.mulf %7, %7 : vector<8x1xf32>
    %11 = arith.subf %9, %10 : vector<8x1xf32>
    %12 = vector.broadcast %7 : vector<8x1xf32> to vector<8x32xf32>
    %13 = arith.subf %0, %12 : vector<8x32xf32>
    %cst_4 = arith.constant 9.99999974E-6 : f32
    %14 = vector.broadcast %cst_4 : f32 to vector<8x1xf32>
    %15 = arith.addf %11, %14 : vector<8x1xf32>
    %16 = math.rsqrt %15 : vector<8x1xf32>
    %17 = vector.broadcast %16 : vector<8x1xf32> to vector<8x32xf32>
    %18 = arith.mulf %13, %17 : vector<8x32xf32>
    %19 = arith.truncf %18 : vector<8x32xf32> to vector<8x32xbf16>
    %c0_5 = arith.constant 0 : index
    %c0_6 = arith.constant 0 : index
    %20 = vector.load %arg2[%c0_5, %c0_6] : memref<32x160xbf16, #tpu.memory_space<vmem>>, vector<32x160xbf16>
    %cst_7 = arith.constant dense<0.000000e+00> : vector<8x160xf32>
    %21 = tpu.matmul %19, %20, %cst_7 {dimension_numbers = #tpu.dot_dimension_numbers<[1], [0], [0], [1], [0, 0, 1, 1], [], []>} : vector<8x32xbf16>, vector<32x160xbf16>, vector<8x160xf32> -> vector<8x160xf32>
    %c0_8 = arith.constant 0 : index
    %c0_9 = arith.constant 0 : index
    %22 = vector.load %arg3[%c0_8, %c0_9] : memref<1x160xf32, #tpu.memory_space<vmem>>, vector<1x160xf32>
    %23 = vector.broadcast %22 : vector<1x160xf32> to vector<8x160xf32>
    %24 = arith.addf %21, %23 : vector<8x160xf32>
    %25 = vector.extract_strided_slice %24 {offsets = [0, 0], sizes = [8, 128], strides = [1, 1]} : vector<8x160xf32> to vector<8x128xf32>
    %26 = vector.extract_strided_slice %24 {offsets = [0, 128], sizes = [8, 32], strides = [1, 1]} : vector<8x160xf32> to vector<8x32xf32>
    %cst_10 = arith.constant 0.000000e+00 : f32
    %27 = vector.broadcast %cst_10 : f32 to vector<8x32xf32>
    %28 = arith.maximumf %26, %27 : vector<8x32xf32>
    %cst_11 = arith.constant dense<0xFF800000> : vector<8xf32>
    %29 = vector.multi_reduction <maximumf>, %25, %cst_11 [1] : vector<8x128xf32> to vector<8xf32>
    %30 = vector.shape_cast %29 : vector<8xf32> to vector<8x1xf32>
    %31 = vector.broadcast %30 : vector<8x1xf32> to vector<8x128xf32>
    %32 = arith.subf %25, %31 : vector<8x128xf32>
    %33 = math.exp %32 : vector<8x128xf32>
    %cst_12 = arith.constant dense<0.000000e+00> : vector<8xf32>
    %34 = vector.multi_reduction <add>, %33, %cst_12 [1] : vector<8x128xf32> to vector<8xf32>
    %35 = vector.shape_cast %34 : vector<8xf32> to vector<8x1xf32>
    %36 = tpu.reciprocal %35 {approx = true} : vector<8x1xf32> -> vector<8x1xf32>
    %37 = vector.broadcast %36 : vector<8x1xf32> to vector<8x128xf32>
    %38 = arith.mulf %33, %37 : vector<8x128xf32>
    %39 = arith.truncf %38 : vector<8x128xf32> to vector<8x128xbf16>
    %c0_13 = arith.constant 0 : index
    %c0_14 = arith.constant 0 : index
    %40 = vector.load %arg6[%c0_13, %c0_14] : memref<128x32xbf16, #tpu.memory_space<vmem>>, vector<128x32xbf16>
    %cst_15 = arith.constant dense<0.000000e+00> : vector<8x32xf32>
    %41 = tpu.matmul %39, %40, %cst_15 {dimension_numbers = #tpu.dot_dimension_numbers<[1], [0], [0], [1], [0, 0, 1, 1], [], []>} : vector<8x128xbf16>, vector<128x32xbf16>, vector<8x32xf32> -> vector<8x32xf32>
    %c0_16 = arith.constant 0 : index
    %c0_17 = arith.constant 0 : index
    %42 = vector.load %arg4[%c0_16, %c0_17] : memref<128x32xbf16, #tpu.memory_space<vmem>>, vector<128x32xbf16>
    %cst_18 = arith.constant dense<0.000000e+00> : vector<8x32xf32>
    %43 = tpu.matmul %39, %42, %cst_18 {dimension_numbers = #tpu.dot_dimension_numbers<[1], [0], [0], [1], [0, 0, 1, 1], [], []>} : vector<8x128xbf16>, vector<128x32xbf16>, vector<8x32xf32> -> vector<8x32xf32>
    %44 = arith.mulf %28, %43 : vector<8x32xf32>
    %45 = arith.truncf %44 : vector<8x32xf32> to vector<8x32xbf16>
    %c0_19 = arith.constant 0 : index
    %c0_20 = arith.constant 0 : index
    %46 = vector.load %arg5[%c0_19, %c0_20] : memref<32x32xbf16, #tpu.memory_space<vmem>>, vector<32x32xbf16>
    %cst_21 = arith.constant dense<0.000000e+00> : vector<8x32xf32>
    %47 = tpu.matmul %45, %46, %cst_21 {dimension_numbers = #tpu.dot_dimension_numbers<[1], [0], [0], [1], [0, 0, 1, 1], [], []>} : vector<8x32xbf16>, vector<32x32xbf16>, vector<8x32xf32> -> vector<8x32xf32>
    %48 = arith.addf %41, %47 : vector<8x32xf32>
    %c0_22 = arith.constant 0 : index
    %c0_23 = arith.constant 0 : index
    %49 = vector.load %arg7[%c0_22, %c0_23] : memref<8x32xf32, #tpu.memory_space<vmem>>, vector<8x32xf32>
    tpu.vector_store %arg7[%c0_22, %c0_23], %48 {strides = array<i32>} : memref<8x32xf32, #tpu.memory_space<vmem>>, vector<8x32xf32>,
    return
  }
  func.func @transform_0(%arg0: i32) -> (i32, i32) {
    %c0_i32 = arith.constant 0 : i32
    %c0_i32_0 = arith.constant 0 : i32
    return %arg0, %c0_i32 : i32, i32
  }
  func.func @transform_1(%arg0: i32) -> (i32, i32) {
    %c0_i32 = arith.constant 0 : i32
    %c0_i32_0 = arith.constant 0 : i32
    %c0_i32_1 = arith.constant 0 : i32
    return %c0_i32, %c0_i32_0 : i32, i32
  }
  func.func @transform_2(%arg0: i32) -> (i32, i32) {
    %c0_i32 = arith.constant 0 : i32
    %c0_i32_0 = arith.constant 0 : i32
    %c0_i32_1 = arith.constant 0 : i32
    return %c0_i32, %c0_i32_0 : i32, i32
  }
  func.func @transform_3(%arg0: i32) -> (i32, i32) {
    %c0_i32 = arith.constant 0 : i32
    %c0_i32_0 = arith.constant 0 : i32
    %c0_i32_1 = arith.constant 0 : i32
    return %c0_i32, %c0_i32_0 : i32, i32
  }
  func.func @transform_4(%arg0: i32) -> (i32, i32) {
    %c0_i32 = arith.constant 0 : i32
    %c0_i32_0 = arith.constant 0 : i32
    %c0_i32_1 = arith.constant 0 : i32
    return %c0_i32, %c0_i32_0 : i32, i32
  }
  func.func @transform_5(%arg0: i32) -> (i32, i32) {
    %c0_i32 = arith.constant 0 : i32
    %c0_i32_0 = arith.constant 0 : i32
    %c0_i32_1 = arith.constant 0 : i32
    return %c0_i32, %c0_i32_0 : i32, i32
  }
  func.func @transform_6(%arg0: i32) -> (i32, i32) {
    %c0_i32 = arith.constant 0 : i32
    %c0_i32_0 = arith.constant 0 : i32
    return %arg0, %c0_i32 : i32, i32
  }
}

</mosaic_0001>

<llo_original>
// kernel: tpu_custom_call.1
$region0: #{tpu_custom_call.1}
  #allocation0 [shape = 'u32[]', space=smem, size = 0x4, offset = 0x4, fixed_abs, tag = 'smem constant byte address 0x4 - core index']
  #allocation1 [shape = 'u32[72,128]{1,0:T(1,128)}', space=vmem, size = 0x9000, scoped, tag = 'internal scratch']
  %s0 = inlined_call_operand.vmem [shape: f32[16,32], index: 0, kind: input, shape index: {}]
  %s1 = inlined_call_operand.vmem [shape: bf16[32,160], index: 1, kind: input, shape index: {}]
  %s2 = inlined_call_operand.vmem [shape: f32[1,160], index: 2, kind: input, shape index: {}]
  %s3 = inlined_call_operand.vmem [shape: bf16[128,32], index: 3, kind: input, shape index: {}]
  %s4 = inlined_call_operand.vmem [shape: bf16[32,32], index: 4, kind: input, shape index: {}]
  %s5 = inlined_call_operand.vmem [shape: bf16[128,32], index: 5, kind: input, shape index: {}]
  %s6 = inlined_call_operand.hbm [shape: f32[16,32], index: 6, kind: output, shape index: {}]
  %s7 = sld [smem:[#allocation0]]
  $region57: #{tpu_custom_call.1} parent=0
    _
  %s9 = ssub.s32 1, %s7
  %s10 = scalar_select 0, %s9, %s7
  $region1: #{tpu_custom_call.1} parent=0
    #allocation2 [shape = 'u8[8192]{0}', space=vmem, size = 0x2000, scoped, tag = 'output window, operand 0']
    #allocation3 [shape = 's32[2]{0}', space=sflag, size = 0x8, scoped, tag = 'scoped memory for tpu_custom_call.1']
    %11 = vsyncpa [#allocation3], 0
    %s12 = scalar_lea.sflag [#allocation3], 1
    %13 = vsyncpa %s12, 0
    loop: start=0, step=1, limit=4
    $region2: #{tpu_custom_call.1} parent=1 // loop_pre_header
      _
    $region3: #{tpu_custom_call.1} parent=1 // loop_header
      %s15 = sphi 0, %s19
      %p16 = scmp.ge.s32.totalorder %s15, 4
      %s25 = sphi 0, %s27
      %s28 = sphi 0, %s25
      %s29 = sphi 0, %s28
      %s45 = sphi 0, %s29
      %s49 = sphi 0, %s49
      %s51 = sphi 0, %s49
      %s52 = sphi 0, %s51
      %s66 = sphi 0, %s52
      %s70 = sphi 0, %s70
      %s72 = sphi 0, %s70
      %s73 = sphi 0, %s72
      %s87 = sphi 0, %s73
      %s91 = sphi 0, %s91
      %s93 = sphi 0, %s91
      %s94 = sphi 0, %s93
      %s108 = sphi 0, %s94
      %s112 = sphi 0, %s112
      %s114 = sphi 0, %s112
      %s115 = sphi 0, %s114
      %s129 = sphi 0, %s115
      %s133 = sphi 0, %s133
      %s135 = sphi 0, %s133
      %s136 = sphi 0, %s135
      %s150 = sphi 0, %s136
      %s156 = sphi 0, %s158
      %s159 = sphi 0, %s156
      %s160 = sphi 0, %s159
      %s176 = sphi 0, %s160
    $region4: #{tpu_custom_call.1} parent=1 // loop_header_branch
      %18 = sbr.rel (%p16) target = $region8
    $region5: #{tpu_custom_call.1} parent=1 // loop_body
      %s20 = ssub.s32 %s15, 1
      %s21 = ssub.s32 %s15, 2
      %s22 = sadd.s32 %s15, 1
      %s23 = ssub.s32 %s15, %s22
      %p24 = scmp.eq.s32.totalorder %s23, 0
      %s26 = sadd.s32 %s25, 1
      %s27 = scalar_select %p24, %s25, %s26
      %p30 = pneg %p24
      %p31 = scmp.eq.s32.totalorder %s15, 1
      %p32 = por %p30, %p31
      %p33 = scmp.ne.s32.totalorder %s25, %s28
      %p34 = scmp.eq.s32.totalorder %s15, 0
      %p35 = por %p33, %p34
      %p36 = scmp.ne.s32.totalorder %s25, %s28
      %p37 = scmp.eq.s32.totalorder %s20, 1
      %p38 = por %p36, %p37
      %p39 = scmp.ne.s32.totalorder %s28, %s29
      %p40 = scmp.eq.s32.totalorder %s20, 0
      %p41 = por %p39, %p40
      %p42 = scmp.ne.s32.totalorder %s28, %s29
      %p43 = scmp.eq.s32.totalorder %s21, 1
      %p44 = por %p42, %p43
      %p46 = scmp.ne.s32.totalorder %s29, %s45
      %p47 = scmp.eq.s32.totalorder %s21, 0
      %p48 = por %p46, %p47
      %s50 = sadd.s32 %s49, 1
      %p53 = scmp.eq.s32.totalorder %s15, 1
      %p54 = scmp.ne.s32.totalorder %s49, %s51
      %p55 = scmp.eq.s32.totalorder %s15, 0
      %p56 = por %p54, %p55
      %p57 = scmp.ne.s32.totalorder %s49, %s51
      %p58 = scmp.eq.s32.totalorder %s20, 1
      %p59 = por %p57, %p58
      %p60 = scmp.ne.s32.totalorder %s51, %s52
      %p61 = scmp.eq.s32.totalorder %s20, 0
      %p62 = por %p60, %p61
      %p63 = scmp.ne.s32.totalorder %s51, %s52
      %p64 = scmp.eq.s32.totalorder %s21, 1
      %p65 = por %p63, %p64
      %p67 = scmp.ne.s32.totalorder %s52, %s66
      %p68 = scmp.eq.s32.totalorder %s21, 0
      %p69 = por %p67, %p68
      %s71 = sadd.s32 %s70, 1
      %p74 = scmp.eq.s32.totalorder %s15, 1
      %p75 = scmp.ne.s32.totalorder %s70, %s72
      %p76 = scmp.eq.s32.totalorder %s15, 0
      %p77 = por %p75, %p76
      %p78 = scmp.ne.s32.totalorder %s70, %s72
      %p79 = scmp.eq.s32.totalorder %s20, 1
      %p80 = por %p78, %p79
      %p81 = scmp.ne.s32.totalorder %s72, %s73
      %p82 = scmp.eq.s32.totalorder %s20, 0
      %p83 = por %p81, %p82
      %p84 = scmp.ne.s32.totalorder %s72, %s73
      %p85 = scmp.eq.s32.totalorder %s21, 1
      %p86 = por %p84, %p85
      %p88 = scmp.ne.s32.totalorder %s73, %s87
      %p89 = scmp.eq.s32.totalorder %s21, 0
      %p90 = por %p88, %p89
      %s92 = sadd.s32 %s91, 1
      %p95 = scmp.eq.s32.totalorder %s15, 1
      %p96 = scmp.ne.s32.totalorder %s91, %s93
      %p97 = scmp.eq.s32.totalorder %s15, 0
      %p98 = por %p96, %p97
      %p99 = scmp.ne.s32.totalorder %s91, %s93
      %p100 = scmp.eq.s32.totalorder %s20, 1
      %p101 = por %p99, %p100
      %p102 = scmp.ne.s32.totalorder %s93, %s94
      %p103 = scmp.eq.s32.totalorder %s20, 0
      %p104 = por %p102, %p103
      %p105 = scmp.ne.s32.totalorder %s93, %s94
      %p106 = scmp.eq.s32.totalorder %s21, 1
      %p107 = por %p105, %p106
      %p109 = scmp.ne.s32.totalorder %s94, %s108
      %p110 = scmp.eq.s32.totalorder %s21, 0
      %p111 = por %p109, %p110
      %s113 = sadd.s32 %s112, 1
      %p116 = scmp.eq.s32.totalorder %s15, 1
      %p117 = scmp.ne.s32.totalorder %s112, %s114
      %p118 = scmp.eq.s32.totalorder %s15, 0
      %p119 = por %p117, %p118
      %p120 = scmp.ne.s32.totalorder %s112, %s114
      %p121 = scmp.eq.s32.totalorder %s20, 1
      %p122 = por %p120, %p121
      %p123 = scmp.ne.s32.totalorder %s114, %s115
      %p124 = scmp.eq.s32.totalorder %s20, 0
      %p125 = por %p123, %p124
      %p126 = scmp.ne.s32.totalorder %s114, %s115
      %p127 = scmp.eq.s32.totalorder %s21, 1
      %p128 = por %p126, %p127
      %p130 = scmp.ne.s32.totalorder %s115, %s129
      %p131 = scmp.eq.s32.totalorder %s21, 0
      %p132 = por %p130, %p131
      %s134 = sadd.s32 %s133, 1
      %p137 = scmp.eq.s32.totalorder %s15, 1
      %p138 = scmp.ne.s32.totalorder %s133, %s135
      %p139 = scmp.eq.s32.totalorder %s15, 0
      %p140 = por %p138, %p139
      %p141 = scmp.ne.s32.totalorder %s133, %s135
      %p142 = scmp.eq.s32.totalorder %s20, 1
      %p143 = por %p141, %p142
      %p144 = scmp.ne.s32.totalorder %s135, %s136
      %p145 = scmp.eq.s32.totalorder %s20, 0
      %p146 = por %p144, %p145
      %p147 = scmp.ne.s32.totalorder %s135, %s136
      %p148 = scmp.eq.s32.totalorder %s21, 1
      %p149 = por %p147, %p148
      %p151 = scmp.ne.s32.totalorder %s136, %s150
      %p152 = scmp.eq.s32.totalorder %s21, 0
      %p153 = por %p151, %p152
      %s154 = ssub.s32 %s15, %s22
      %p155 = scmp.eq.s32.totalorder %s154, 0
      %s157 = sadd.s32 %s156, 1
      %s158 = scalar_select %p155, %s156, %s157
      %p161 = pneg %p155
      %p162 = scmp.eq.s32.totalorder %s15, 1
      %p163 = por %p161, %p162
      %p164 = scmp.ne.s32.totalorder %s156, %s159
      %p165 = scmp.eq.s32.totalorder %s15, 0
      %p166 = por %p164, %p165
      %p167 = scmp.ne.s32.totalorder %s156, %s159
      %p168 = scmp.eq.s32.totalorder %s20, 1
      %p169 = por %p167, %p168
      %p170 = scmp.ne.s32.totalorder %s159, %s160
      %p171 = scmp.eq.s32.totalorder %s20, 0
      %p172 = por %p170, %p171
      %p173 = scmp.ne.s32.totalorder %s159, %s160
      %p174 = scmp.eq.s32.totalorder %s21, 1
      %p175 = por %p173, %p174
      %p177 = scmp.ne.s32.totalorder %s160, %s176
      %p178 = scmp.eq.s32.totalorder %s21, 0
      %p179 = por %p177, %p178
      %p180 = scmp.le.s32.totalorder 1, %s15
      %p181 = scmp.lt.s32.totalorder %s15, 3
      %p182 = pnand %p180, %p181
      %p183 = pneg %p182
      // Predicated region
      $region9: #{tpu_custom_call.1} parent=5 // pred_check
        _
      $region10: #{tpu_custom_call.1} parent=5 // pred_check_branch
        %185 = sbr.rel (%p182) target = $region12
      $region11: #{tpu_custom_call.1} parent=5 // pred_region
        %s186 = ssub.s32 %s15, 1
        // Predicated region
        $region13: #{tpu_custom_call.1} parent=11 // pred_check
          %p187 = pneg %p62
        $region14: #{tpu_custom_call.1} parent=11 // pred_check_branch
          %189 = sbr.rel (%p187) target = $region16
        $region15: #{tpu_custom_call.1} parent=11 // pred_region
          _
        $region16: #{tpu_custom_call.1} parent=11 // pred_fallthru
          _
        // Predicated region
        $region17: #{tpu_custom_call.1} parent=11 // pred_check
          %p190 = pneg %p83
        $region18: #{tpu_custom_call.1} parent=11 // pred_check_branch
          %192 = sbr.rel (%p190) target = $region20
        $region19: #{tpu_custom_call.1} parent=11 // pred_region
          _
        $region20: #{tpu_custom_call.1} parent=11 // pred_fallthru
          _
        // Predicated region
        $region21: #{tpu_custom_call.1} parent=11 // pred_check
          %p193 = pneg %p104
        $region22: #{tpu_custom_call.1} parent=11 // pred_check_branch
          %195 = sbr.rel (%p193) target = $region24
        $region23: #{tpu_custom_call.1} parent=11 // pred_region
          _
        $region24: #{tpu_custom_call.1} parent=11 // pred_fallthru
          _
        // Predicated region
        $region25: #{tpu_custom_call.1} parent=11 // pred_check
          %p196 = pneg %p125
        $region26: #{tpu_custom_call.1} parent=11 // pred_check_branch
          %198 = sbr.rel (%p196) target = $region28
        $region27: #{tpu_custom_call.1} parent=11 // pred_region
          _
        $region28: #{tpu_custom_call.1} parent=11 // pred_fallthru
          _
        // Predicated region
        $region29: #{tpu_custom_call.1} parent=11 // pred_check
          %p199 = pneg %p146
        $region30: #{tpu_custom_call.1} parent=11 // pred_check_branch
          %201 = sbr.rel (%p199) target = $region32
        $region31: #{tpu_custom_call.1} parent=11 // pred_region
          _
        $region32: #{tpu_custom_call.1} parent=11 // pred_fallthru
          _
      $region12: #{tpu_custom_call.1} parent=5 // pred_fallthru
        _
      %p202 = scmp.lt.s32.totalorder %s15, 2
      // Predicated region
      $region33: #{tpu_custom_call.1} parent=5 // pred_check
        %p203 = pneg %p202
      $region34: #{tpu_custom_call.1} parent=5 // pred_check_branch
        %205 = sbr.rel (%p203) target = $region36
      $region35: #{tpu_custom_call.1} parent=5 // pred_region
        // Predicated region
        $region37: #{tpu_custom_call.1} parent=35 // pred_check
          %p206 = pneg %p35
        $region38: #{tpu_custom_call.1} parent=35 // pred_check_branch
          %208 = sbr.rel (%p206) target = $region40
        $region39: #{tpu_custom_call.1} parent=35 // pred_region
          %p209 = scmp.lt.s32.totalorder %s15, 1
          %s210 = scalar_select %p209, %s15, 1
          %s211 = smul.addr %s210, 8
          %s212 = scalar_lea.vmem %s0, %s211
        $region40: #{tpu_custom_call.1} parent=35 // pred_fallthru
          _
      $region36: #{tpu_custom_call.1} parent=5 // pred_fallthru
        _
      %p213 = scmp.le.s32.totalorder 1, %s15
      %p214 = scmp.lt.s32.totalorder %s15, 3
      %p215 = pnand %p213, %p214
      %p216 = pneg %p215
      // Predicated region
      $region41: #{tpu_custom_call.1} parent=5 // pred_check
        _
      $region42: #{tpu_custom_call.1} parent=5 // pred_check_branch
        %218 = sbr.rel (%p215) target = $region44
      $region43: #{tpu_custom_call.1} parent=5 // pred_region
        %s219 = ssub.s32 %s15, 1
        %p220 = scmp.lt.s32.totalorder %s20, 1
        %s221 = scalar_select %p220, %s20, 1
        %s222 = smul.addr %s221, 8
        %s223 = scalar_lea.vmem %s0, %s222
        %p224 = pneg %p41
        %p225 = pneg %p38
        %p226 = pneg %p62
        %p227 = pneg %p59
        %p228 = pneg %p83
        %p229 = pneg %p80
        %p230 = pneg %p104
        %p231 = pneg %p101
        %p232 = pneg %p125
        %p233 = pneg %p122
        %p234 = pneg %p146
        %p235 = pneg %p143
        %p236 = pneg %p172
        %p237 = pneg %p169
        %s238 = sand.u32 %s159, 1
        %s239 = scalar_lea.sflag [#allocation3], %s238
        %s240 = sand.u32 %s159, 1
        %s241 = smul.addr %s240, 8
        %s242 = scalar_lea.vmem [#allocation2], %s241
        %p243 = scmp.lt.s32.totalorder %s20, 1
        %s244 = scalar_select %p243, %s20, 1
        %s245 = smul.addr %s244, 8
        %s246 = scalar_lea.vmem %s0, %s245
        %v248 = vld [vmem:[%s246] sm:$0xff]
        %vm249 = vcmask 261120
        %v250 = vsel %vm249, %v248, 0.0
        %251 = vadd.xlane.f32.xlu0 %v250
        %v252 = vpop.xlane.xlu0 %251
        %v253 = vmul.f32 %v248, %v248
        %v254 = vsel %vm249, %v253, 0.0
        %255 = vadd.xlane.f32.xlu0 %v254
        %v256 = vpop.xlane.xlu0 %255
        %v257 = vmul.f32 %v252, 0.03125
        %v258 = vmul.f32 %v256, 0.03125
        %v259 = vmul.f32 %v257, %v257
        %v260 = vsub.f32 %v258, %v259
        %v261 = vsub.f32 %v248, %v257
        %v262 = vadd.f32 %v260, 1e-05
        %v263 = vrsqrt.pop %v262
        %v264 = vmul.f32 %v263, %v262
        %v265 = vmul.f32 %v264, %v263
        %v266 = vmul.f32 0.5, %v265
        %v267 = vsub.f32 1.5, %v266
        %v268 = vmul.f32 %v263, %v267
        %vm269 = vweird.f32 %v262
        %vm270 = vweird.f32 %v263
        %vm271 = vmor %vm269, %vm270
        %v272 = vsel %vm271, %v263, %v268
        %v273 = vmul.f32 %v261, %v272
        %v274 = vpack.c.bf16 %v273, %v273
        %v275 = vld [vmem:[%s1] sm:$0xff]
        %v276 = vld [vmem:[%s1 + $0x8] sm:$0xff]
        %v277 = vld [vmem:[%s1 + $0x10] sm:$0xff]
        %v278 = vld [vmem:[%s1 + $0x18] sm:$0xff]
        %v279 = vld [vmem:[%s2] sm:$0x3]
        %v281 = vperm.slane %v279, 0
        %v282 = vperm.slane %v279, 1
        %v289 = vunpack.c.l.b16 %v275
        %v290 = vunpack.c.h.b16 %v275
        %v291 = vunpack.c.l.b16 %v276
        %v292 = vunpack.c.h.b16 %v276
        %v293 = vunpack.c.l.b16 %v277
        %v294 = vunpack.c.h.b16 %v277
        %v295 = vunpack.c.l.b16 %v278
        %v296 = vunpack.c.h.b16 %v278
        %v297 = vpack.c.b16 %v291, %v289
        %v298 = vpack.c.b16 %v292, %v290
        %v299 = vpack.c.b16 %v295, %v293
        %v300 = vpack.c.b16 %v296, %v294
        %v306 = vsel %vm249, %v274, 0
        %308 = vmatpush.bf16.msra.mxu0 0
        %309 = vmatpush.bf16.msra.mxu0 0
        %310 = vmatpush.bf16.msra.mxu0 0
        %311 = vmatpush.bf16.msra.mxu0 0
        %312 = vmatpush.bf16.msra.mxu0 0
        %313 = vmatpush.bf16.msra.mxu0 0
        %314 = vmatpush.bf16.msra.mxu0 %v299
        %315 = vmatpush.bf16.msra.mxu0 %v297
        %316 = vmatmul.bf16.gmra.mxu0 %v306
        %v317 = vpop.f32.mrf.mxu0
        %v318 = vadd.f32 %v281, %v317
        %v319 = vpop.f32.mrf.mxu0
        %320 = vdwg.mxu0
        %321 = vmatpush.bf16.msra.mxu0 0
        %322 = vmatpush.bf16.msra.mxu0 0
        %323 = vmatpush.bf16.msra.mxu0 0
        %324 = vmatpush.bf16.msra.mxu0 0
        %325 = vmatpush.bf16.msra.mxu0 0
        %326 = vmatpush.bf16.msra.mxu0 0
        %327 = vmatpush.bf16.msra.mxu0 %v300
        %328 = vmatpush.bf16.msra.mxu0 %v298
        %329 = vmatmul.bf16.gmra.mxu0 %v306
        %v330 = vpop.f32.mrf.mxu0
        %v331 = vadd.f32 %v282, %v330
        %v332 = vpop.f32.mrf.mxu0
        %333 = vdwg.mxu0
        %v334 = vmax.f32 %v331, 0.0
        %335 = vmax.xlane.f32.xlu0 %v318
        %v336 = vpop.xlane.xlu0 %335
        %v337 = vsub.f32 %v318, %v336
        %v338 = vmul.f32 %v337, 1.442695
        %v339 = vpow.pop %v338
        %340 = vadd.xlane.f32.xlu0 %v339
        %v341 = vpop.xlane.xlu0 %340
        %v342 = vrcp.pop %v341
        %v343 = vmul.f32 %v339, %v342
        %v344 = vpack.c.bf16 %v343, %v343
        %v345 = vld [vmem:[%s5] sm:$0xf]
        %v346 = vld [vmem:[%s5 + $0x4] sm:$0xf]
        %v347 = vld [vmem:[%s5 + $0x8] sm:$0xf]
        %v348 = vld [vmem:[%s5 + $0xc] sm:$0xf]
        %v349 = vld [vmem:[%s5 + $0x10] sm:$0xf]
        %v350 = vld [vmem:[%s5 + $0x14] sm:$0xf]
        %v351 = vld [vmem:[%s5 + $0x18] sm:$0xf]
        %v352 = vld [vmem:[%s5 + $0x1c] sm:$0xf]
        %v353 = vld [vmem:[%s5 + $0x20] sm:$0xf]
        %v354 = vld [vmem:[%s5 + $0x24] sm:$0xf]
        %v355 = vld [vmem:[%s5 + $0x28] sm:$0xf]
        %v356 = vld [vmem:[%s5 + $0x2c] sm:$0xf]
        %v357 = vld [vmem:[%s5 + $0x30] sm:$0xf]
        %v358 = vld [vmem:[%s5 + $0x34] sm:$0xf]
        %v359 = vld [vmem:[%s5 + $0x38] sm:$0xf]
        %v360 = vld [vmem:[%s5 + $0x3c] sm:$0xf]
        %v361 = vld [vmem:[%s3] sm:$0xf]
        %v362 = vld [vmem:[%s3 + $0x4] sm:$0xf]
        %v363 = vld [vmem:[%s3 + $0x8] sm:$0xf]
        %v364 = vld [vmem:[%s3 + $0xc] sm:$0xf]
        %v365 = vld [vmem:[%s3 + $0x10] sm:$0xf]
        %v366 = vld [vmem:[%s3 + $0x14] sm:$0xf]
        %v367 = vld [vmem:[%s3 + $0x18] sm:$0xf]
        %v368 = vld [vmem:[%s3 + $0x1c] sm:$0xf]
        %v369 = vld [vmem:[%s3 + $0x20] sm:$0xf]
        %v370 = vld [vmem:[%s3 + $0x24] sm:$0xf]
        %v371 = vld [vmem:[%s3 + $0x28] sm:$0xf]
        %v372 = vld [vmem:[%s3 + $0x2c] sm:$0xf]
        %v373 = vld [vmem:[%s3 + $0x30] sm:$0xf]
        %v374 = vld [vmem:[%s3 + $0x34] sm:$0xf]
        %v375 = vld [vmem:[%s3 + $0x38] sm:$0xf]
        %v376 = vld [vmem:[%s3 + $0x3c] sm:$0xf]
        %v393 = vunpack.c.l.b16 %v361
        %v394 = vunpack.c.l.b16 %v362
        %v395 = vunpack.c.l.b16 %v363
        %v396 = vunpack.c.l.b16 %v364
        %v397 = vunpack.c.l.b16 %v365
        %v398 = vunpack.c.l.b16 %v366
        %v399 = vunpack.c.l.b16 %v367
        %v400 = vunpack.c.l.b16 %v368
        %v401 = vunpack.c.l.b16 %v369
        %v402 = vunpack.c.l.b16 %v370
        %v403 = vunpack.c.l.b16 %v371
        %v404 = vunpack.c.l.b16 %v372
        %v405 = vunpack.c.l.b16 %v373
        %v406 = vunpack.c.l.b16 %v374
        %v407 = vunpack.c.l.b16 %v375
        %v408 = vunpack.c.l.b16 %v376
        %v409 = vpack.c.b16 %v394, %v393
        %v410 = vpack.c.b16 %v396, %v395
        %v411 = vpack.c.b16 %v398, %v397
        %v412 = vpack.c.b16 %v400, %v399
        %v413 = vpack.c.b16 %v402, %v401
        %v414 = vpack.c.b16 %v404, %v403
        %v415 = vpack.c.b16 %v406, %v405
        %v416 = vpack.c.b16 %v408, %v407
        %425 = vmatpush.bf16.msra.mxu0 %v416
        %426 = vmatpush.bf16.msra.mxu0 %v415
        %427 = vmatpush.bf16.msra.mxu0 %v414
        %428 = vmatpush.bf16.msra.mxu0 %v413
        %429 = vmatpush.bf16.msra.mxu0 %v412
        %430 = vmatpush.bf16.msra.mxu0 %v411
        %431 = vmatpush.bf16.msra.mxu0 %v410
        %432 = vmatpush.bf16.msra.mxu0 %v409
        %433 = vmatmul.bf16.gmra.mxu0 %v344
        %v434 = vpop.f32.mrf.mxu0
        %v435 = vadd.f32 0.0, %v434
        %v436 = vpop.f32.mrf.mxu0
        %437 = vdwg.mxu0
        %v438 = vmul.f32 %v334, %v435
        %v439 = vpack.c.bf16 %v438, %v438
        %v440 = vld [vmem:[%s4] sm:$0xf]
        %v441 = vld [vmem:[%s4 + $0x4] sm:$0xf]
        %v442 = vld [vmem:[%s4 + $0x8] sm:$0xf]
        %v443 = vld [vmem:[%s4 + $0xc] sm:$0xf]
        %v448 = vunpack.c.l.b16 %v440
        %v449 = vunpack.c.l.b16 %v441
        %v450 = vunpack.c.l.b16 %v442
        %v451 = vunpack.c.l.b16 %v443
        %v452 = vpack.c.b16 %v449, %v448
        %v453 = vpack.c.b16 %v451, %v450
        %v457 = vsel %vm249, %v439, 0
        %459 = vmatpush.bf16.msra.mxu0 0
        %460 = vmatpush.bf16.msra.mxu0 0
        %461 = vmatpush.bf16.msra.mxu0 0
        %462 = vmatpush.bf16.msra.mxu0 0
        %463 = vmatpush.bf16.msra.mxu0 0
        %464 = vmatpush.bf16.msra.mxu0 0
        %465 = vmatpush.bf16.msra.mxu0 %v453
        %466 = vmatpush.bf16.msra.mxu0 %v452
        %467 = vmatmul.bf16.gmra.mxu0 %v457
        %v468 = vpop.f32.mrf.mxu0
        %v469 = vadd.f32 0.0, %v468
        %v470 = vpop.f32.mrf.mxu0
        %471 = vdwg.mxu0
        %v488 = vunpack.c.l.b16 %v345
        %v489 = vunpack.c.l.b16 %v346
        %v490 = vunpack.c.l.b16 %v347
        %v491 = vunpack.c.l.b16 %v348
        %v492 = vunpack.c.l.b16 %v349
        %v493 = vunpack.c.l.b16 %v350
        %v494 = vunpack.c.l.b16 %v351
        %v495 = vunpack.c.l.b16 %v352
        %v496 = vunpack.c.l.b16 %v353
        %v497 = vunpack.c.l.b16 %v354
        %v498 = vunpack.c.l.b16 %v355
        %v499 = vunpack.c.l.b16 %v356
        %v500 = vunpack.c.l.b16 %v357
        %v501 = vunpack.c.l.b16 %v358
        %v502 = vunpack.c.l.b16 %v359
        %v503 = vunpack.c.l.b16 %v360
        %v504 = vpack.c.b16 %v489, %v488
        %v505 = vpack.c.b16 %v491, %v490
        %v506 = vpack.c.b16 %v493, %v492
        %v507 = vpack.c.b16 %v495, %v494
        %v508 = vpack.c.b16 %v497, %v496
        %v509 = vpack.c.b16 %v499, %v498
        %v510 = vpack.c.b16 %v501, %v500
        %v511 = vpack.c.b16 %v503, %v502
        %520 = vmatpush.bf16.msra.mxu0 %v511
        %521 = vmatpush.bf16.msra.mxu0 %v510
        %522 = vmatpush.bf16.msra.mxu0 %v509
        %523 = vmatpush.bf16.msra.mxu0 %v508
        %524 = vmatpush.bf16.msra.mxu0 %v507
        %525 = vmatpush.bf16.msra.mxu0 %v506
        %526 = vmatpush.bf16.msra.mxu0 %v505
        %527 = vmatpush.bf16.msra.mxu0 %v504
        %528 = vmatmul.bf16.gmra.mxu0 %v344
        %v529 = vpop.f32.mrf.mxu0
        %v530 = vadd.f32 %v469, %v529
        %v531 = vpop.f32.mrf.mxu0
        %532 = vdwg.mxu0
        %533 = vst.msk [vmem:[%s242] sm:$0xff] %vm249, %v530
        %s534 = sand.u32 %s159, 1
        %s535 = scalar_lea.sflag [#allocation3], %s534
        %s536 = sand.u32 %s159, 1
        %s537 = smul.addr %s536, 8
        %s538 = scalar_lea.vmem [#allocation2], %s537
        // Predicated region
        $region45: #{tpu_custom_call.1} parent=43 // pred_check
          %p539 = pneg %p169
        $region46: #{tpu_custom_call.1} parent=43 // pred_check_branch
          %541 = sbr.rel (%p539) target = $region48
        $region47: #{tpu_custom_call.1} parent=43 // pred_region
          %543 = vsyncadd %s535, 0
          %s544 = smul.addr %s20, 8
          %s545 = scalar_lea.hbm %s6, %s544
          %s547 = sshll.u32 %s538, 4
          %s548 = int_to_ptr.vmem [resolvable:$true] %s547
          %s549 = sshll.u32 %s545, 4
          %s550 = int_to_ptr.hbm [resolvable:$true] %s549
          %552 = dma.vmem_to_hbm [thread:$0]  %s548, 128, %s550, %s535
        $region48: #{tpu_custom_call.1} parent=43 // pred_fallthru
          _
      $region44: #{tpu_custom_call.1} parent=5 // pred_fallthru
        _
      %p553 = scmp.le.s32.totalorder 2, %s15
      // Predicated region
      $region49: #{tpu_custom_call.1} parent=5 // pred_check
        %p554 = pneg %p553
      $region50: #{tpu_custom_call.1} parent=5 // pred_check_branch
        %556 = sbr.rel (%p554) target = $region52
      $region51: #{tpu_custom_call.1} parent=5 // pred_region
        %s557 = ssub.s32 %s15, 2
        // Predicated region
        $region53: #{tpu_custom_call.1} parent=51 // pred_check
          %p558 = pneg %p175
        $region54: #{tpu_custom_call.1} parent=51 // pred_check_branch
          %560 = sbr.rel (%p558) target = $region56
        $region55: #{tpu_custom_call.1} parent=51 // pred_region
          %s561 = sand.u32 %s160, 1
          %s562 = scalar_lea.sflag [#allocation3], %s561
          %s563 = sand.u32 %s160, 1
          %s564 = smul.addr %s563, 8
          %s565 = scalar_lea.vmem [#allocation2], %s564
          %567 = dma.done %s562, 128
        $region56: #{tpu_custom_call.1} parent=51 // pred_fallthru
          _
      $region52: #{tpu_custom_call.1} parent=5 // pred_fallthru
        _
    $region6: #{tpu_custom_call.1} parent=1 // loop_footer
      %s19 = sadd.s32 1, %s15
    $region7: #{tpu_custom_call.1} parent=1 // loop_footer_branch
      %14 = sbr.rel target = $region3
    $region8: #{tpu_custom_call.1} parent=1 // loop_exit
      _
    %568 = vsyncpa [#allocation3], 1
    %s569 = scalar_lea.sflag [#allocation3], 1
    %570 = vsyncpa %s569, 1

</llo_original>
